<compile_context>
chip_gen: v5e
topology: v5e:2x2
jax: 0.10.0
libtpu: 0.0.40
codegen_flags: <defaults>
</compile_context>

<pallas_src>
import functools
import math

import jax
import jax.numpy as jnp
from jax.experimental import pallas as pl
from jax.experimental.pallas import tpu as pltpu


N_MEL = 16
N_FRAMES_PER_STEP = 1
FEAT_IN = N_MEL + 1          # ONMT speech feature: first column dropped by narrow(2, 1, ...)
HID = 32
POSTNET_EMB = 32
POSTNET_K = 5
POSTNET_LAYERS = 5

_VMEM_LIMIT = 32 * 1024 * 1024     # fits scoped VMEM on v5e/v6e/v7x with the tile sizes below
_TILE_M = 512                      # M-tile cap for row-tiled matmuls (safe for v7x's 64 MiB VMEM)


def _pick_tile(n, cap=256):
    """Largest friendly tile that divides n (full n for small/ragged n)."""
    if n <= cap:
        return n
    for t in (cap, 256, 128):
        if t <= cap and n % t == 0:
            return t
    # TODO(synk): ragged long T falls back to a whole-extent block (correct, less pipelined).
    return n


# ---------------------------------------------------------------------------
# Kernel 1: fused encoder (Linear+tanh) + decoder prenet/query (Linear+relu), row-tiled
# ---------------------------------------------------------------------------

def _enc_prenet_kernel(src_ref, dec_ref, we_ref, be_ref, wq_ref, bq_ref, ctx_ref, q_ref):
    e = jnp.dot(src_ref[...], we_ref[...], preferred_element_type=jnp.float32) + be_ref[...]
    ctx_ref[...] = jnp.tanh(e).astype(ctx_ref.dtype)
    qv = jnp.dot(dec_ref[...], wq_ref[...], preferred_element_type=jnp.float32) + bq_ref[...]
    q_ref[...] = jnp.maximum(qv, 0.0).astype(q_ref.dtype)


def encoder_prenet(src_bt, dec_bt, params, tile_m=_TILE_M):
    """src_bt:(M,FEAT_IN), dec_bt:(M,N_MEL) -> (context (M,H) bf16, q (M,H) bf16)."""
    M, F = src_bt.shape
    src_bt = src_bt.astype(jnp.bfloat16)
    dec_bt = dec_bt.astype(jnp.bfloat16)
    if M <= tile_m:
        tm, Mp = M, M
    else:
        tm = tile_m                                   # multiple of 8
        Mp = ((M + tm - 1) // tm) * tm
        if Mp != M:
            src_bt = jnp.pad(src_bt, ((0, Mp - M), (0, 0)))
            dec_bt = jnp.pad(dec_bt, ((0, Mp - M), (0, 0)))
    ctx, q = pl.pallas_call(
        _enc_prenet_kernel,
        out_shape=(jax.ShapeDtypeStruct((Mp, HID), jnp.bfloat16),
                   jax.ShapeDtypeStruct((Mp, HID), jnp.bfloat16)),
        grid=(Mp // tm,),
        in_specs=[
            pl.BlockSpec((tm, F), lambda i: (i, 0)),
            pl.BlockSpec((tm, N_MEL), lambda i: (i, 0)),
            pl.BlockSpec((F, HID), lambda i: (0, 0)),
            pl.BlockSpec((1, HID), lambda i: (0, 0)),
            pl.BlockSpec((N_MEL, HID), lambda i: (0, 0)),
            pl.BlockSpec((1, HID), lambda i: (0, 0)),
        ],
        out_specs=(pl.BlockSpec((tm, HID), lambda i: (i, 0)),
                   pl.BlockSpec((tm, HID), lambda i: (i, 0))),
        compiler_params=pltpu.CompilerParams(
            dimension_semantics=("parallel",), vmem_limit_bytes=_VMEM_LIMIT),
    )(src_bt, dec_bt, params["enc_w"], params["enc_b"], params["q_w"], params["q_b"])
    if Mp != M:
        ctx, q = ctx[:M], q[:M]
    return ctx, q


# ---------------------------------------------------------------------------
# Kernel 2: fused attention (in-kernel pad mask + softmax) + mel/gate projection
# ---------------------------------------------------------------------------

def _attn_proj_kernel(len_enc_ref, len_org_ref, q_ref, c_ref, wq_ref, wa_ref, b_ref,
                      align_ref, mel_ref, gate_ref, *, scale, tile_t, n_mel):
    b = pl.program_id(0)
    ti = pl.program_id(1)
    q = q_ref[...]                                   # (tile_t, H)  bf16
    c = c_ref[...]                                   # (Te, H)      bf16
    # scores[t, e] = sum_h q[t, h] * c[e, h]
    s = jax.lax.dot_general(q, c, (((1,), (1,)), ((), ())),
                            preferred_element_type=jnp.float32) * scale      # (tile_t, Te)
    col = jax.lax.broadcasted_iota(jnp.int32, s.shape, 1)
    s = jnp.where(col >= len_enc_ref[b], jnp.float32(-1e9), s)
    s = s - jnp.max(s, axis=-1, keepdims=True)
    e = jnp.exp(s)
    a = e / jnp.sum(e, axis=-1, keepdims=True)
    align_ref[...] = a.astype(align_ref.dtype)
    att = jnp.dot(a.astype(c.dtype), c, preferred_element_type=jnp.float32)  # (tile_t, H)
    # fused mel+gate projection, lane-dense (n_mel+1, tile_t)
    dn = (((1,), (1,)), ((), ()))
    y = jax.lax.dot_general(wq_ref[...], q, dn, preferred_element_type=jnp.float32)
    y = y + jax.lax.dot_general(wa_ref[...], att.astype(jnp.bfloat16), dn,
                                preferred_element_type=jnp.float32)
    y = y + b_ref[...]                               # (n_mel+1, 1) broadcast
    mel_ref[...] = y[:n_mel, :].astype(mel_ref.dtype)
    tcol = jax.lax.broadcasted_iota(jnp.int32, (1, tile_t), 1) + ti * tile_t
    gate = y[n_mel:, :]                              # (1, tile_t)
    gate_ref[...] = jnp.where(tcol >= len_org_ref[b], jnp.float32(1000.0), gate
                              ).astype(gate_ref.dtype)


def attention_projection(q, context, params, src_lengths, src_lengths_org):
    """q,context:(B,T,H) bf16 -> alignments (B,T,T) f32, mel_dec (B,n_mel,T) f32, gate (B,1,T) f32."""
    B, Td, H = q.shape
    _, Te, _ = context.shape
    nrows = N_MEL + 1
    tile_t = _pick_tile(Td)
    kern = functools.partial(_attn_proj_kernel, scale=1.0 / math.sqrt(H),
                             tile_t=tile_t, n_mel=N_MEL)
    grid_spec = pltpu.PrefetchScalarGridSpec(
        num_scalar_prefetch=2,
        grid=(B, Td // tile_t),
        in_specs=[
            pl.BlockSpec((None, tile_t, H), lambda b, t, l1, l2: (b, t, 0)),
            pl.BlockSpec((None, Te, H), lambda b, t, l1, l2: (b, 0, 0)),
            pl.BlockSpec((nrows, H), lambda b, t, l1, l2: (0, 0)),
            pl.BlockSpec((nrows, H), lambda b, t, l1, l2: (0, 0)),
            pl.BlockSpec((nrows, 1), lambda b, t, l1, l2: (0, 0)),
        ],
        out_specs=(
            pl.BlockSpec((None, tile_t, Te), lambda b, t, l1, l2: (b, t, 0)),
            pl.BlockSpec((None, N_MEL, tile_t), lambda b, t, l1, l2: (b, 0, t)),
            pl.BlockSpec((None, 1, tile_t), lambda b, t, l1, l2: (b, 0, t)),
        ),
    )
    align, mel_dec, gate = pl.pallas_call(
        kern,
        out_shape=(jax.ShapeDtypeStruct((B, Td, Te), jnp.float32),
                   jax.ShapeDtypeStruct((B, N_MEL, Td), jnp.float32),
                   jax.ShapeDtypeStruct((B, 1, Td), jnp.float32)),
        grid_spec=grid_spec,
        compiler_params=pltpu.CompilerParams(
            dimension_semantics=("parallel", "parallel"), vmem_limit_bytes=_VMEM_LIMIT),
    )(src_lengths.astype(jnp.int32), src_lengths_org.astype(jnp.int32),
      q, context, params["proj_wq_t"], params["proj_wa_t"], params["proj_b_t"])
    return align, mel_dec, gate


# ---------------------------------------------------------------------------
# Kernel 3: fully fused postnet (5x halo Conv1d(k=5)+foldedBN(+tanh)) + residual + masks
# ---------------------------------------------------------------------------

def _postnet_kernel(len_ref, x_ref, w_ref, b_ref, mel_ref, post_ref, buf_a, buf_b,
                    *, K, T, n_layers, n_mel):
    b = pl.program_id(0)
    pad = (K - 1) // 2
    c_max = w_ref.shape[2]
    # zero both ping-pong slabs: halo columns and unused channel rows stay zero for all layers
    buf_a[...] = jnp.zeros_like(buf_a)
    buf_b[...] = jnp.zeros_like(buf_b)
    x = x_ref[...]                                         # (n_mel, T) f32 (decoder mel, residual)
    buf_a[0:n_mel, pad:pad + T] = x.astype(buf_a.dtype)
    bufs = (buf_a, buf_b)
    for l in range(n_layers):
        cur = bufs[l % 2]
        nxt = bufs[(l + 1) % 2]
        acc = jnp.zeros((c_max, T), jnp.float32)
        for k in range(K):                                  # K shifted matmuls over the halo slab
            acc = acc + jnp.dot(w_ref[l, k], cur[:, k:k + T],
                                preferred_element_type=jnp.float32)
        y = acc + b_ref[l]                                  # folded BN bias, (c_max, 1)
        if l < n_layers - 1:
            nxt[:, pad:pad + T] = jnp.tanh(y).astype(nxt.dtype)
        else:
            # last conv (no tanh): residual add + parse_output masking fused here
            padm = jax.lax.broadcasted_iota(jnp.int32, (n_mel, T), 1) >= len_ref[b]
            mel_ref[...] = jnp.where(padm, 0.0, x).astype(mel_ref.dtype)
            post_ref[...] = jnp.where(padm, 0.0, x + y[:n_mel, :]).astype(post_ref.dtype)


def postnet(mel_dec, params, lengths_org, K=POSTNET_K, n_layers=POSTNET_LAYERS):
    """mel_dec:(B,n_mel,T) f32 -> (mel_outputs, mel_outputs_postnet), both masked, f32."""
    B, C, T = mel_dec.shape
    pad = (K - 1) // 2
    c_max = params["postnet_w"].shape[2]
    kern = functools.partial(_postnet_kernel, K=K, T=T, n_layers=n_layers, n_mel=N_MEL)
    grid_spec = pltpu.PrefetchScalarGridSpec(
        num_scalar_prefetch=1,
        grid=(B,),
        in_specs=[
            pl.BlockSpec((None, C, T), lambda b, lens: (b, 0, 0)),
            pl.BlockSpec((n_layers, K, c_max, c_max), lambda b, lens: (0, 0, 0, 0)),
            pl.BlockSpec((n_layers, c_max, 1), lambda b, lens: (0, 0, 0)),
        ],
        out_specs=(
            pl.BlockSpec((None, C, T), lambda b, lens: (b, 0, 0)),
            pl.BlockSpec((None, C, T), lambda b, lens: (b, 0, 0)),
        ),
        scratch_shapes=[pltpu.VMEM((c_max, T + 2 * pad), jnp.bfloat16),
                        pltpu.VMEM((c_max, T + 2 * pad), jnp.bfloat16)],
    )
    mel, post = pl.pallas_call(
        kern,
        out_shape=(jax.ShapeDtypeStruct((B, C, T), jnp.float32),
                   jax.ShapeDtypeStruct((B, C, T), jnp.float32)),
        grid_spec=grid_spec,
        compiler_params=pltpu.CompilerParams(
            dimension_semantics=("parallel",), vmem_limit_bytes=_VMEM_LIMIT),
    )(lengths_org.astype(jnp.int32), mel_dec, params["postnet_w"], params["postnet_b"])
    return mel, post


# ---------------------------------------------------------------------------
# Parameters: raw init (PyTorch-like) + one-time prepare (BN folding, bf16 cast, fusion)
# ---------------------------------------------------------------------------

def init_params(key):
    def lin(k, fan_in, fan_out):
        kw, kb = jax.random.split(k)
        w = jax.random.normal(kw, (fan_in, fan_out), jnp.float32) / math.sqrt(fan_in)
        b = 0.01 * jax.random.normal(kb, (fan_out,), jnp.float32)
        return w, b

    keys = jax.random.split(key, 8 + POSTNET_LAYERS)
    p = {}
    p["enc_w"], p["enc_b"] = lin(keys[0], FEAT_IN, HID)              # encoder: Linear + tanh
    p["q_w"], p["q_b"] = lin(keys[1], N_MEL, HID)                    # decoder prenet / query proj
    p["mel_w"], p["mel_b"] = lin(keys[2], 2 * HID, N_MEL)            # decoder mel projection
    p["gate_w"], p["gate_b"] = lin(keys[3], 2 * HID, 1)              # decoder gate projection
    chans = [N_MEL] + [POSTNET_EMB] * (POSTNET_LAYERS - 1) + [N_MEL]
    p["postnet"] = []
    for i in range(POSTNET_LAYERS):
        cin, cout = chans[i], chans[i + 1]
        kw, kb = jax.random.split(keys[4 + i])
        w = jax.random.normal(kw, (cout, cin, POSTNET_K), jnp.float32) / math.sqrt(cin * POSTNET_K)
        b = 0.01 * jax.random.normal(kb, (cout,), jnp.float32)
        p["postnet"].append({
            "w": w, "b": b,
            "gamma": jnp.ones((cout,), jnp.float32),
            "beta": jnp.zeros((cout,), jnp.float32),
            "mean": jnp.zeros((cout,), jnp.float32),
            "var": jnp.ones((cout,), jnp.float32),
        })
    return p


def prepare_params(p):
    """One-time: bf16 casts, bias reshapes, BN folding, mel+gate fusion, uniform postnet stack."""
    H = HID
    c_max = POSTNET_EMB
    pp = {
        "enc_w": p["enc_w"].astype(jnp.bfloat16),
        "enc_b": p["enc_b"].reshape(1, -1).astype(jnp.float32),
        "q_w": p["q_w"].astype(jnp.bfloat16),
        "q_b": p["q_b"].reshape(1, -1).astype(jnp.float32),
        # fused mel+gate projection, transposed for lane-dense (n_mel+1, T) outputs
        "proj_wq_t": jnp.concatenate([p["mel_w"][:H].T, p["gate_w"][:H].T], axis=0).astype(jnp.bfloat16),
        "proj_wa_t": jnp.concatenate([p["mel_w"][H:].T, p["gate_w"][H:].T], axis=0).astype(jnp.bfloat16),
        "proj_b_t": jnp.concatenate([p["mel_b"], p["gate_b"]]).reshape(-1, 1).astype(jnp.float32),
    }
    w_stack, b_stack = [], []
    for layer in p["postnet"]:
        scale = layer["gamma"] / jnp.sqrt(layer["var"] + 1e-5)
        shift = layer["beta"] - layer["mean"] * scale
        w = layer["w"] * scale[:, None, None]                        # fold BN into conv weight
        beff = layer["b"] * scale + shift
        wk = jnp.transpose(w, (2, 0, 1))                             # (K, Cout, Cin)
        _, cout, cin = wk.shape
        wk = jnp.pad(wk, ((0, 0), (0, c_max - cout), (0, c_max - cin)))   # zero-pad to uniform
        b2 = jnp.pad(beff, (0, c_max - cout)).reshape(c_max, 1)
        w_stack.append(wk)
        b_stack.append(b2)
    pp["postnet_w"] = jnp.stack(w_stack).astype(jnp.bfloat16)        # (L, K, 32, 32)
    pp["postnet_b"] = jnp.stack(b_stack).astype(jnp.float32)         # (L, 32, 1)
    return pp


# ---------------------------------------------------------------------------
# SpeechAE forward
# ---------------------------------------------------------------------------

def speech_ae_forward(params, batch):
    src = batch["source"]                     # (T, B, FEAT_IN)
    src_org = batch["source_org"]             # (T, B, FEAT_IN)
    src_lengths = batch["src_lengths"]        # (B,)
    src_lengths_org = batch["src_lengths_org"]

    T, B, F = src.shape

    # ---- src.transpose(0,1) and src_org.narrow(2,1,F-1).permute(1,2,0) (teacher forcing) ----
    src_bt = jnp.transpose(src, (1, 0, 2)).reshape(B * T, F)
    dec_bt = jnp.transpose(src_org[:, :, 1:], (1, 0, 2)).reshape(B * T, N_MEL)

    # ---- fused encoder (Linear+tanh -> 'context') + decoder prenet/query (Linear+relu) ------
    context, q = encoder_prenet(src_bt, dec_bt, params)
    context = context.reshape(B, T, HID)                              # context.transpose(0,1)
    q = q.reshape(B, T, HID)

    # ---- fused attention + mel/gate projection (gate pad-fill 1000.0 applied in-kernel) -----
    alignments, mel_dec, gate = attention_projection(
        q, context, params, src_lengths, src_lengths_org)
    gate_outputs = gate[:, 0, :]                                      # (B, T) already pad-filled

    # ---- fully fused postnet (5 conv layers) + residual add + parse_output mel masking ------
    mel_outputs, mel_outputs_postnet = postnet(mel_dec, params, src_lengths_org)

    return [mel_outputs, mel_outputs_postnet, gate_outputs, alignments]


# ---------------------------------------------------------------------------
# main
# ---------------------------------------------------------------------------

if __name__ == "__main__":
    key = jax.random.PRNGKey(0)
    k_params, k_src, k_src_org = jax.random.split(key, 3)

    B, T = 2, 8
    params = prepare_params(init_params(k_params))

    batch = {
        "source": jax.random.normal(k_src, (T, B, FEAT_IN), jnp.float32),
        "source_org": jax.random.normal(k_src_org, (T, B, FEAT_IN), jnp.float32),
        "src_lengths": jnp.array([8, 6], jnp.int32),
        "src_lengths_org": jnp.array([8, 6], jnp.int32),
    }

    outputs = speech_ae_forward(params, batch)
    for o in outputs:
        jax.block_until_ready(o)

    mel, mel_post, gate, align = outputs
    assert mel.shape == (B, N_MEL, T)
    assert mel_post.shape == (B, N_MEL, T)
    assert gate.shape == (B, T)
    assert align.shape == (B, T, T)
    assert bool(jnp.all(jnp.isfinite(mel))) and bool(jnp.all(jnp.isfinite(mel_post)))
    # attention rows sum to 1 over valid encoder positions
    assert bool(jnp.all(jnp.abs(jnp.sum(align, axis=-1) - 1.0) < 1e-3))
    # padded frames (length 6 for batch 1) must be masked: mel==0, gate==1000
    assert bool(jnp.all(mel[1, :, 6:] == 0.0))
    assert bool(jnp.all(mel_post[1, :, 6:] == 0.0))
    assert bool(jnp.all(gate[1, 6:] == 1000.0))
    print("KERNEL_OK")
</pallas_src>

<mosaic_0001>
module attributes {stable_mosaic.version = 11 : i64} {
  func.func @_enc_prenet_kernel(%arg0: i32, %arg1: memref<16x17xbf16, #tpu.memory_space<vmem>>, %arg2: memref<16x16xbf16, #tpu.memory_space<vmem>>, %arg3: memref<17x32xbf16, #tpu.memory_space<vmem>>, %arg4: memref<1x32xf32, #tpu.memory_space<vmem>>, %arg5: memref<16x32xbf16, #tpu.memory_space<vmem>>, %arg6: memref<1x32xf32, #tpu.memory_space<vmem>>, %arg7: memref<16x32xbf16, #tpu.memory_space<vmem>>, %arg8: memref<16x32xbf16, #tpu.memory_space<vmem>>) attributes {dimension_semantics = [#tpu.dimension_semantics<parallel>], iteration_bounds = array<i64: 1>, scalar_prefetch = 0 : i64, scratch_operands = 0 : i64, tpu.core_type = #tpu.core_type<tc>, window_params = [{transform_indices = @transform_0, window_bounds = array<i64: 16, 17>}, {transform_indices = @transform_1, window_bounds = array<i64: 16, 16>}, {pipeline_mode = #tpu.pipeline_mode<synchronous>, transform_indices = @transform_2, window_bounds = array<i64: 17, 32>}, {pipeline_mode = #tpu.pipeline_mode<synchronous>, transform_indices = @transform_3, window_bounds = array<i64: 1, 32>}, {pipeline_mode = #tpu.pipeline_mode<synchronous>, transform_indices = @transform_4, window_bounds = array<i64: 16, 32>}, {pipeline_mode = #tpu.pipeline_mode<synchronous>, transform_indices = @transform_5, window_bounds = array<i64: 1, 32>}, {transform_indices = @transform_6, window_bounds = array<i64: 16, 32>}, {transform_indices = @transform_7, window_bounds = array<i64: 16, 32>}]} {
    %c0 = arith.constant 0 : index
    %c0_0 = arith.constant 0 : index
    %0 = vector.load %arg1[%c0, %c0_0] : memref<16x17xbf16, #tpu.memory_space<vmem>>, vector<16x17xbf16>
    %c0_1 = arith.constant 0 : index
    %c0_2 = arith.constant 0 : index
    %1 = vector.load %arg3[%c0_1, %c0_2] : memref<17x32xbf16, #tpu.memory_space<vmem>>, vector<17x32xbf16>
    %cst = arith.constant dense<0.000000e+00> : vector<16x32xf32>
    %2 = tpu.matmul %0, %1, %cst {dimension_numbers = #tpu.dot_dimension_numbers<[1], [0], [0], [1], [0, 0, 1, 1], [], []>} : vector<16x17xbf16>, vector<17x32xbf16>, vector<16x32xf32> -> vector<16x32xf32>
    %c0_3 = arith.constant 0 : index
    %c0_4 = arith.constant 0 : index
    %3 = vector.load %arg4[%c0_3, %c0_4] : memref<1x32xf32, #tpu.memory_space<vmem>>, vector<1x32xf32>
    %4 = vector.broadcast %3 : vector<1x32xf32> to vector<16x32xf32>
    %5 = arith.addf %2, %4 : vector<16x32xf32>
    %6 = math.tanh %5 : vector<16x32xf32>
    %7 = arith.truncf %6 : vector<16x32xf32> to vector<16x32xbf16>
    %c0_5 = arith.constant 0 : index
    %c0_6 = arith.constant 0 : index
    %8 = vector.load %arg7[%c0_5, %c0_6] : memref<16x32xbf16, #tpu.memory_space<vmem>>, vector<16x32xbf16>
    tpu.vector_store %arg7[%c0_5, %c0_6], %7 {strides = array<i32>} : memref<16x32xbf16, #tpu.memory_space<vmem>>, vector<16x32xbf16>,
    %c0_7 = arith.constant 0 : index
    %c0_8 = arith.constant 0 : index
    %9 = vector.load %arg2[%c0_7, %c0_8] : memref<16x16xbf16, #tpu.memory_space<vmem>>, vector<16x16xbf16>
    %c0_9 = arith.constant 0 : index
    %c0_10 = arith.constant 0 : index
    %10 = vector.load %arg5[%c0_9, %c0_10] : memref<16x32xbf16, #tpu.memory_space<vmem>>, vector<16x32xbf16>
    %cst_11 = arith.constant dense<0.000000e+00> : vector<16x32xf32>
    %11 = tpu.matmul %9, %10, %cst_11 {dimension_numbers = #tpu.dot_dimension_numbers<[1], [0], [0], [1], [0, 0, 1, 1], [], []>} : vector<16x16xbf16>, vector<16x32xbf16>, vector<16x32xf32> -> vector<16x32xf32>
    %c0_12 = arith.constant 0 : index
    %c0_13 = arith.constant 0 : index
    %12 = vector.load %arg6[%c0_12, %c0_13] : memref<1x32xf32, #tpu.memory_space<vmem>>, vector<1x32xf32>
    %13 = vector.broadcast %12 : vector<1x32xf32> to vector<16x32xf32>
    %14 = arith.addf %11, %13 : vector<16x32xf32>
    %cst_14 = arith.constant 0.000000e+00 : f32
    %15 = vector.broadcast %cst_14 : f32 to vector<16x32xf32>
    %16 = arith.maximumf %14, %15 : vector<16x32xf32>
    %17 = arith.truncf %16 : vector<16x32xf32> to vector<16x32xbf16>
    %c0_15 = arith.constant 0 : index
    %c0_16 = arith.constant 0 : index
    %18 = vector.load %arg8[%c0_15, %c0_16] : memref<16x32xbf16, #tpu.memory_space<vmem>>, vector<16x32xbf16>
    tpu.vector_store %arg8[%c0_15, %c0_16], %17 {strides = array<i32>} : memref<16x32xbf16, #tpu.memory_space<vmem>>, vector<16x32xbf16>,
    return
  }
  func.func @transform_0(%arg0: i32) -> (i32, i32) {
    %c0_i32 = arith.constant 0 : i32
    %c0_i32_0 = arith.constant 0 : i32
    return %arg0, %c0_i32 : i32, i32
  }
  func.func @transform_1(%arg0: i32) -> (i32, i32) {
    %c0_i32 = arith.constant 0 : i32
    %c0_i32_0 = arith.constant 0 : i32
    return %arg0, %c0_i32 : i32, i32
  }
  func.func @transform_2(%arg0: i32) -> (i32, i32) {
    %c0_i32 = arith.constant 0 : i32
    %c0_i32_0 = arith.constant 0 : i32
    %c0_i32_1 = arith.constant 0 : i32
    return %c0_i32, %c0_i32_0 : i32, i32
  }
  func.func @transform_3(%arg0: i32) -> (i32, i32) {
    %c0_i32 = arith.constant 0 : i32
    %c0_i32_0 = arith.constant 0 : i32
    %c0_i32_1 = arith.constant 0 : i32
    return %c0_i32, %c0_i32_0 : i32, i32
  }
  func.func @transform_4(%arg0: i32) -> (i32, i32) {
    %c0_i32 = arith.constant 0 : i32
    %c0_i32_0 = arith.constant 0 : i32
    %c0_i32_1 = arith.constant 0 : i32
    return %c0_i32, %c0_i32_0 : i32, i32
  }
  func.func @transform_5(%arg0: i32) -> (i32, i32) {
    %c0_i32 = arith.constant 0 : i32
    %c0_i32_0 = arith.constant 0 : i32
    %c0_i32_1 = arith.constant 0 : i32
    return %c0_i32, %c0_i32_0 : i32, i32
  }
  func.func @transform_6(%arg0: i32) -> (i32, i32) {
    %c0_i32 = arith.constant 0 : i32
    %c0_i32_0 = arith.constant 0 : i32
    return %arg0, %c0_i32 : i32, i32
  }
  func.func @transform_7(%arg0: i32) -> (i32, i32) {
    %c0_i32 = arith.constant 0 : i32
    %c0_i32_0 = arith.constant 0 : i32
    return %arg0, %c0_i32 : i32, i32
  }
}

</mosaic_0001>

<llo_original>
// kernel: tpu_custom_call.1
$region0: #{tpu_custom_call.1}
  #allocation0 [shape = 'u32[]', space=smem, size = 0x4, offset = 0x4, fixed_abs, tag = 'smem constant byte address 0x4 - core index']
  #allocation1 [shape = 'u32[72,128]{1,0:T(1,128)}', space=vmem, size = 0x9000, scoped, tag = 'internal scratch']
  %s0 = inlined_call_operand.hbm [shape: bf16[16,17], index: 0, kind: input, shape index: {}]
  %s1 = inlined_call_operand.hbm [shape: bf16[16,16], index: 1, kind: input, shape index: {}]
  %s2 = inlined_call_operand.hbm [shape: bf16[17,32], index: 2, kind: input, shape index: {}]
  %s3 = inlined_call_operand.vmem [shape: f32[1,32], index: 3, kind: input, shape index: {}]
  %s4 = inlined_call_operand.hbm [shape: bf16[16,32], index: 4, kind: input, shape index: {}]
  %s5 = inlined_call_operand.vmem [shape: f32[1,32], index: 5, kind: input, shape index: {}]
  %s6 = inlined_call_operand.hbm [shape: bf16[16,32], index: 6, kind: output, shape index: {0}]
  %s7 = inlined_call_operand.hbm [shape: bf16[16,32], index: 7, kind: output, shape index: {1}]
  %8 = xla_tuple %s6, %s7
  %s9 = sld [smem:[#allocation0]]
  $region58: #{tpu_custom_call.1} parent=0
    _
  %s11 = ssub.s32 1, %s9
  %s12 = scalar_select 0, %s11, %s9
  $region1: #{tpu_custom_call.1} parent=0
    #allocation2 [shape = 'u8[4096]{0}', space=vmem, size = 0x1000, scoped, tag = 'input window, operand 0, single buffered']
    #allocation3 [shape = 's32[1]{0}', space=sflag, size = 0x4, scoped, tag = 'scoped memory for tpu_custom_call.1']
    #allocation4 [shape = 's32[1]{0}', space=sflag, size = 0x4, scoped, tag = 'scoped memory for tpu_custom_call.1']
    #allocation5 [shape = 'u8[4096]{0}', space=vmem, size = 0x1000, scoped, tag = 'input window, operand 1, single buffered']
    #allocation6 [shape = 's32[1]{0}', space=sflag, size = 0x4, scoped, tag = 'scoped memory for tpu_custom_call.1']
    #allocation7 [shape = 'u8[6144]{0}', space=vmem, size = 0x1800, scoped, tag = 'input window, operand 2, single buffered']
    #allocation8 [shape = 'u8[4096]{0}', space=vmem, size = 0x1000, scoped, tag = 'input window, operand 4, single buffered']
    #allocation9 [shape = 's32[1]{0}', space=sflag, size = 0x4, scoped, tag = 'scoped memory for tpu_custom_call.1']
    #allocation10 [shape = 'u8[4096]{0}', space=vmem, size = 0x1000, scoped, tag = 'output window, operand 0, single buffered']
    #allocation11 [shape = 'u8[4096]{0}', space=vmem, size = 0x1000, scoped, tag = 'output window, operand 1, single buffered']
    #allocation12 [shape = 's32[1]{0}', space=sflag, size = 0x4, scoped, tag = 'scoped memory for tpu_custom_call.1']
    %13 = vsyncpa [#allocation3], 0
    %14 = vsyncpa [#allocation6], 0
    %15 = vsyncpa [#allocation9], 0
    %16 = vsyncpa [#allocation4], 0
    %17 = vsyncpa [#allocation12], 0
    // Predicated region
    $region2: #{tpu_custom_call.1} parent=1 // pred_check
      _
    $region3: #{tpu_custom_call.1} parent=1 // pred_check_branch
      %19 = sbr.rel (0) target = $region5
    $region4: #{tpu_custom_call.1} parent=1 // pred_region
      %21 = vsyncadd [#allocation3], 0
      %s22 = sshll.u32 %s0, 4
      %s23 = int_to_ptr.hbm [resolvable:$true] %s22
      %s24 = sshll.u32 [#allocation2], 4
      %s25 = int_to_ptr.vmem [resolvable:$true] %s24
      %30 = dma.hbm_to_vmem [thread:$0]  %s23, 128, %s25, [#allocation3], 64, 64, 4
    $region5: #{tpu_custom_call.1} parent=1 // pred_fallthru
      _
    // Predicated region
    $region6: #{tpu_custom_call.1} parent=1 // pred_check
      _
    $region7: #{tpu_custom_call.1} parent=1 // pred_check_branch
      %32 = sbr.rel (0) target = $region9
    $region8: #{tpu_custom_call.1} parent=1 // pred_region
      %34 = vsyncadd [#allocation6], 0
      %s35 = sshll.u32 %s1, 4
      %s36 = int_to_ptr.hbm [resolvable:$true] %s35
      %s37 = sshll.u32 [#allocation5], 4
      %s38 = int_to_ptr.vmem [resolvable:$true] %s37
      %43 = dma.hbm_to_vmem [thread:$0]  %s36, 128, %s38, [#allocation6], 64, 64, 4
    $region9: #{tpu_custom_call.1} parent=1 // pred_fallthru
      _
    // Predicated region
    $region10: #{tpu_custom_call.1} parent=1 // pred_check
      _
    $region11: #{tpu_custom_call.1} parent=1 // pred_check_branch
      %45 = sbr.rel (0) target = $region13
    $region12: #{tpu_custom_call.1} parent=1 // pred_region
      %47 = vsyncadd [#allocation6], 0
      %s48 = sshll.u32 %s2, 4
      %s49 = int_to_ptr.hbm [resolvable:$true] %s48
      %s50 = sshll.u32 [#allocation7], 4
      %s51 = int_to_ptr.vmem [resolvable:$true] %s50
      %56 = dma.hbm_to_vmem [thread:$0]  %s49, 192, %s51, [#allocation6], 64, 64, 4
    $region13: #{tpu_custom_call.1} parent=1 // pred_fallthru
      _
    // Predicated region
    $region14: #{tpu_custom_call.1} parent=1 // pred_check
      _
    $region15: #{tpu_custom_call.1} parent=1 // pred_check_branch
      %58 = sbr.rel (0) target = $region17
    $region16: #{tpu_custom_call.1} parent=1 // pred_region
      _
    $region17: #{tpu_custom_call.1} parent=1 // pred_fallthru
      _
    // Predicated region
    $region18: #{tpu_custom_call.1} parent=1 // pred_check
      _
    $region19: #{tpu_custom_call.1} parent=1 // pred_check_branch
      %60 = sbr.rel (0) target = $region21
    $region20: #{tpu_custom_call.1} parent=1 // pred_region
      %62 = vsyncadd [#allocation9], 0
      %s63 = sshll.u32 %s4, 4
      %s64 = int_to_ptr.hbm [resolvable:$true] %s63
      %s65 = sshll.u32 [#allocation8], 4
      %s66 = int_to_ptr.vmem [resolvable:$true] %s65
      %71 = dma.hbm_to_vmem [thread:$0]  %s64, 128, %s66, [#allocation9], 64, 64, 4
    $region21: #{tpu_custom_call.1} parent=1 // pred_fallthru
      _
    // Predicated region
    $region22: #{tpu_custom_call.1} parent=1 // pred_check
      _
    $region23: #{tpu_custom_call.1} parent=1 // pred_check_branch
      %73 = sbr.rel (0) target = $region25
    $region24: #{tpu_custom_call.1} parent=1 // pred_region
      _
    $region25: #{tpu_custom_call.1} parent=1 // pred_fallthru
      _
    // Predicated region
    $region26: #{tpu_custom_call.1} parent=1 // pred_check
      _
    $region27: #{tpu_custom_call.1} parent=1 // pred_check_branch
      %75 = sbr.rel (0) target = $region29
    $region28: #{tpu_custom_call.1} parent=1 // pred_region
      %77 = dma.done [#allocation3], 128
    $region29: #{tpu_custom_call.1} parent=1 // pred_fallthru
      _
    // Predicated region
    $region30: #{tpu_custom_call.1} parent=1 // pred_check
      _
    $region31: #{tpu_custom_call.1} parent=1 // pred_check_branch
      %79 = sbr.rel (0) target = $region33
    $region32: #{tpu_custom_call.1} parent=1 // pred_region
      %81 = dma.done [#allocation6], 128
    $region33: #{tpu_custom_call.1} parent=1 // pred_fallthru
      _
    // Predicated region
    $region34: #{tpu_custom_call.1} parent=1 // pred_check
      _
    $region35: #{tpu_custom_call.1} parent=1 // pred_check_branch
      %83 = sbr.rel (0) target = $region37
    $region36: #{tpu_custom_call.1} parent=1 // pred_region
      %85 = dma.done [#allocation6], 192
    $region37: #{tpu_custom_call.1} parent=1 // pred_fallthru
      _
    // Predicated region
    $region38: #{tpu_custom_call.1} parent=1 // pred_check
      _
    $region39: #{tpu_custom_call.1} parent=1 // pred_check_branch
      %87 = sbr.rel (0) target = $region41
    $region40: #{tpu_custom_call.1} parent=1 // pred_region
      %89 = dma.done [#allocation9], 128
    $region41: #{tpu_custom_call.1} parent=1 // pred_fallthru
      _
    %v91 = vld [vmem:[#allocation2] sm:$0xf]
    %v92 = vld [vmem:[#allocation2 + $0x4] sm:$0xf]
    %v93 = vld [vmem:[#allocation7] sm:$0xf]
    %v94 = vld [vmem:[#allocation7 + $0x4] sm:$0xf]
    %v95 = vld [vmem:[#allocation7 + $0x8] sm:$0x1]
    %v96 = vld [vmem:[%s3] sm:$0x1]
    %v98 = vperm.slane %v96, 0
    %v102 = vunpack.c.l.b16 %v91
    %v103 = vunpack.c.l.b16 %v92
    %v104 = vpack.c.b16 %v103, %v102
    %v108 = vunpack.c.l.b16 %v93
    %v109 = vunpack.c.l.b16 %v94
    %v110 = vunpack.c.l.b16 %v95
    %v111 = vpack.c.b16 %v109, %v108
    %v112 = vpack.c.b16 %v110, %v110
    %vm114 = vcmask 138240
    %v116 = vsel %vm114, %v104, 0
    %vm118 = vcmask 1040384
    %v119 = vsel 0, 4294967295, 65535
    %v120 = vsel %vm118, %v119, 0
    %v122 = vand.u32 %v112, %v120
    %124 = vmatpush.bf16.msra.mxu0 0
    %125 = vmatpush.bf16.msra.mxu0 0
    %126 = vmatpush.bf16.msra.mxu0 0
    %127 = vmatpush.bf16.msra.mxu0 0
    %128 = vmatpush.bf16.msra.mxu0 0
    %129 = vmatpush.bf16.msra.mxu0 0
    %130 = vmatpush.bf16.msra.mxu0 %v122
    %131 = vmatpush.bf16.msra.mxu0 %v111
    %132 = vmatmul.bf16.gmra.mxu0 %v116
    %v133 = vpop.f32.mrf.mxu0
    %v134 = vadd.f32 %v98, %v133
    %v135 = vpop.f32.mrf.mxu0
    %v136 = vadd.f32 %v98, %v135
    %137 = vdwg.mxu0
    %v138 = vtanh.pop %v134
    %v139 = vtanh.pop %v136
    %v140 = vpack.c.bf16 %v138, %v138
    %v141 = vpack.c.bf16 %v139, %v139
    %vm142 = vcmask 257024
    %143 = vst.msk [vmem:[#allocation10] sm:$0xf] %vm142, %v140
    %144 = vst.msk [vmem:[#allocation10 + $0x4] sm:$0xf] %vm142, %v141
    %v145 = vld [vmem:[#allocation5] sm:$0xf]
    %v146 = vld [vmem:[#allocation5 + $0x4] sm:$0xf]
    %v147 = vld [vmem:[#allocation8] sm:$0xf]
    %v148 = vld [vmem:[#allocation8 + $0x4] sm:$0xf]
    %v149 = vld [vmem:[%s5] sm:$0x1]
    %v151 = vperm.slane %v149, 0
    %v155 = vunpack.c.l.b16 %v145
    %v156 = vunpack.c.l.b16 %v146
    %v157 = vpack.c.b16 %v156, %v155
    %v160 = vunpack.c.l.b16 %v147
    %v161 = vunpack.c.l.b16 %v148
    %v162 = vpack.c.b16 %v161, %v160
    %vm164 = vcmask 130048
    %v166 = vsel %vm164, %v157, 0
    %168 = vmatpush.bf16.msra.mxu0 0
    %169 = vmatpush.bf16.msra.mxu0 0
    %170 = vmatpush.bf16.msra.mxu0 0
    %171 = vmatpush.bf16.msra.mxu0 0
    %172 = vmatpush.bf16.msra.mxu0 0
    %173 = vmatpush.bf16.msra.mxu0 0
    %174 = vmatpush.bf16.msra.mxu0 0
    %175 = vmatpush.bf16.msra.mxu0 %v162
    %176 = vmatmul.bf16.gmra.mxu0 %v166
    %v177 = vpop.f32.mrf.mxu0
    %v178 = vadd.f32 %v151, %v177
    %v179 = vpop.f32.mrf.mxu0
    %v180 = vadd.f32 %v151, %v179
    %181 = vdwg.mxu0
    %v182 = vmax.f32 %v178, 0.0
    %v183 = vmax.f32 %v180, 0.0
    %v184 = vpack.c.bf16 %v182, %v182
    %v185 = vpack.c.bf16 %v183, %v183
    %186 = vst.msk [vmem:[#allocation11] sm:$0xf] %vm142, %v184
    %187 = vst.msk [vmem:[#allocation11 + $0x4] sm:$0xf] %vm142, %v185
    // Predicated region
    $region42: #{tpu_custom_call.1} parent=1 // pred_check
      _
    $region43: #{tpu_custom_call.1} parent=1 // pred_check_branch
      %189 = sbr.rel (0) target = $region45
    $region44: #{tpu_custom_call.1} parent=1 // pred_region
      %191 = vsyncadd [#allocation4], 0
      %s192 = sshll.u32 [#allocation10], 4
      %s193 = int_to_ptr.vmem [resolvable:$true] %s192
      %s194 = sshll.u32 %s6, 4
      %s195 = int_to_ptr.hbm [resolvable:$true] %s194
      %200 = dma.vmem_to_hbm [thread:$0]  %s193, 128, %s195, [#allocation4], 64, 64, 4
    $region45: #{tpu_custom_call.1} parent=1 // pred_fallthru
      _
    // Predicated region
    $region46: #{tpu_custom_call.1} parent=1 // pred_check
      _
    $region47: #{tpu_custom_call.1} parent=1 // pred_check_branch
      %202 = sbr.rel (0) target = $region49
    $region48: #{tpu_custom_call.1} parent=1 // pred_region
      %204 = vsyncadd [#allocation12], 0
      %s205 = sshll.u32 [#allocation11], 4
      %s206 = int_to_ptr.vmem [resolvable:$true] %s205
      %s207 = sshll.u32 %s7, 4
      %s208 = int_to_ptr.hbm [resolvable:$true] %s207
      %213 = dma.vmem_to_hbm [thread:$0]  %s206, 128, %s208, [#allocation12], 64, 64, 4
    $region49: #{tpu_custom_call.1} parent=1 // pred_fallthru
      _
    // Predicated region
    $region50: #{tpu_custom_call.1} parent=1 // pred_check
      _
    $region51: #{tpu_custom_call.1} parent=1 // pred_check_branch
      %215 = sbr.rel (0) target = $region53
    $region52: #{tpu_custom_call.1} parent=1 // pred_region
      %217 = dma.done [#allocation4], 128
    $region53: #{tpu_custom_call.1} parent=1 // pred_fallthru
      _
    // Predicated region
    $region54: #{tpu_custom_call.1} parent=1 // pred_check
      _
    $region55: #{tpu_custom_call.1} parent=1 // pred_check_branch
      %219 = sbr.rel (0) target = $region57
    $region56: #{tpu_custom_call.1} parent=1 // pred_region
      %221 = dma.done [#allocation12], 128
    $region57: #{tpu_custom_call.1} parent=1 // pred_fallthru
      _
    %222 = vsyncpa [#allocation3], 1
    %223 = vsyncpa [#allocation6], 1
    %224 = vsyncpa [#allocation9], 1
    %225 = vsyncpa [#allocation4], 1
    %226 = vsyncpa [#allocation12], 1

</llo_original>
